<compile_context>
chip_gen: v5e
topology: v5e:2x2
jax: 0.10.0
libtpu: 0.0.40
codegen_flags: <defaults>
</compile_context>

<pallas_src>
import functools

import jax
import jax.numpy as jnp
from jax.experimental import pallas as pl
from jax.experimental.pallas import tpu as pltpu


VMEM_LIMIT = 48 * 1024 * 1024     # headroom below v7x 64 MiB physical; fine on v5e/v6e
CARD_LANES = 128                  # lane-dense cardinality output width


def _tile(n, pref, min_t=128):
    """Largest halving of `pref` (down to min_t) dividing n, else the full dim."""
    t = pref
    while t >= min_t:
        if n >= t and n % t == 0:
            return t
        t //= 2
    return n


def _hll_alpha(m):
    # TODO(synk): exact ElphHashes.hll_count small/large-range bias corrections
    #             (linear counting) are not applied; only the standard alpha_m is.
    if m == 16:
        return 0.673
    if m == 32:
        return 0.697
    if m == 64:
        return 0.709
    return 0.7213 / (1.0 + 1.079 / m)


# ----------------------------- Pallas kernels ------------------------------

def linear_kernel(x_ref, w_ref, b_ref, o_ref):
    # o = x @ W + b   (bf16 MXU operands, f32 accumulate, bias f32)
    o_ref[...] = (
        jnp.dot(x_ref[...].astype(jnp.bfloat16), w_ref[...],
                preferred_element_type=jnp.float32)
        + b_ref[...]
    ).astype(o_ref.dtype)


def matmul_kernel(x_ref, w_ref, o_ref):
    # o = x @ W   (no bias; output bf16 feeds the spmm)
    o_ref[...] = jnp.dot(x_ref[...].astype(jnp.bfloat16), w_ref[...],
                         preferred_element_type=jnp.float32).astype(o_ref.dtype)


def gcn_spmm_kernel(adj_ref, xw_ref, b_ref, xres_ref, o_ref, *, residual):
    # out = A_norm @ XW + b (+ x residual), accumulated in the resident f32 output block
    k = pl.program_id(1)

    @pl.when(k == 0)
    def _():
        o_ref[...] = jnp.zeros_like(o_ref)

    o_ref[...] += jnp.dot(adj_ref[...], xw_ref[...],
                          preferred_element_type=jnp.float32)

    @pl.when(k == pl.num_programs(1) - 1)
    def _():
        out = o_ref[...] + b_ref[...]
        if residual:
            out = out + xres_ref[...]
        o_ref[...] = out


def hash_prop_kernel(adj_ref, mh_ref, hll_ref, mh_out_ref, hll_out_ref, card_ref,
                     *, alpha):
    # adjacency block: [ts (source rows), td (destination lanes)] f32 (>0 == edge).
    # For each destination: minhash = min over masked sources, hll = max over masked
    # sources.  One mask load shared by both reductions.  Output blocks are the
    # running accumulators (resident across the source-chunk grid axis).
    s = pl.program_id(1)
    i32max = jnp.iinfo(jnp.int32).max

    @pl.when(s == 0)
    def _():
        mh_out_ref[...] = jnp.full_like(mh_out_ref, i32max)
        hll_out_ref[...] = jnp.zeros_like(hll_out_ref)

    ts = adj_ref.shape[0]
    sub = 8 if ts % 8 == 0 else ts        # process 8 source rows per step to bound the
    for j in range(ts // sub):            # [sub, td, P] candidate intermediate
        sl = pl.ds(j * sub, sub)
        mask = (adj_ref[sl, :] > 0.0)[:, :, None]          # [sub, td, 1]
        mh_s = mh_ref[sl, :][:, None, :]                   # [sub, 1, P]
        hl_s = hll_ref[sl, :][:, None, :]                  # [sub, 1, R]
        mh_out_ref[...] = jnp.minimum(
            mh_out_ref[...],
            jnp.min(jnp.where(mask, mh_s, i32max), axis=0))
        hll_out_ref[...] = jnp.maximum(
            hll_out_ref[...],
            jnp.max(jnp.where(mask, hl_s, 0), axis=0))

    @pl.when(s == pl.num_programs(1) - 1)
    def _():
        # Fused HyperLogLog estimate (EUP exp is free behind the VPU-bound reduction).
        regs = hll_out_ref[...].astype(jnp.float32)        # [td, R]
        m = regs.shape[1]
        ln2 = 0.6931471805599453
        harm = jnp.sum(jnp.exp(-regs * ln2), axis=1, keepdims=True)   # [td, 1]
        est = (alpha * m * m) / harm
        card_ref[...] = jnp.broadcast_to(est, card_ref.shape)         # lane-dense store


# ----------------------------- kernel wrappers ------------------------------

def pallas_linear(x, w_bf16, b):
    n, f = x.shape
    h = w_bf16.shape[1]
    tm = _tile(n, 256)
    return pl.pallas_call(
        linear_kernel,
        grid=(n // tm,),
        in_specs=[pl.BlockSpec((tm, f), lambda i: (i, 0)),
                  pl.BlockSpec((f, h), lambda i: (0, 0)),
                  pl.BlockSpec((1, h), lambda i: (0, 0))],
        out_specs=pl.BlockSpec((tm, h), lambda i: (i, 0)),
        out_shape=jax.ShapeDtypeStruct((n, h), jnp.float32),
        compiler_params=pltpu.CompilerParams(
            dimension_semantics=("parallel",),
            vmem_limit_bytes=VMEM_LIMIT),
    )(x, w_bf16, b)


def pallas_matmul(x, w_bf16):
    n, f = x.shape
    h = w_bf16.shape[1]
    tm = _tile(n, 256)
    return pl.pallas_call(
        matmul_kernel,
        grid=(n // tm,),
        in_specs=[pl.BlockSpec((tm, f), lambda i: (i, 0)),
                  pl.BlockSpec((f, h), lambda i: (0, 0))],
        out_specs=pl.BlockSpec((tm, h), lambda i: (i, 0)),
        out_shape=jax.ShapeDtypeStruct((n, h), jnp.bfloat16),
        compiler_params=pltpu.CompilerParams(
            dimension_semantics=("parallel",),
            vmem_limit_bytes=VMEM_LIMIT),
    )(x, w_bf16)


def pallas_gcn_spmm(adj_norm_bf16, xw_bf16, b, x_res, *, residual):
    n = adj_norm_bf16.shape[0]
    h = xw_bf16.shape[1]
    tm = _tile(n, 256)
    tk = _tile(n, 512)
    kernel = functools.partial(gcn_spmm_kernel, residual=residual)
    flops = 2 * n * n * h
    bytes_accessed = 2 * n * n + 2 * n * h + 4 * n * h * 2
    return pl.pallas_call(
        kernel,
        grid=(n // tm, n // tk),
        in_specs=[pl.BlockSpec((tm, tk), lambda i, k: (i, k)),
                  pl.BlockSpec((tk, h), lambda i, k: (k, 0)),
                  pl.BlockSpec((1, h), lambda i, k: (0, 0)),
                  pl.BlockSpec((tm, h), lambda i, k: (i, 0))],
        out_specs=pl.BlockSpec((tm, h), lambda i, k: (i, 0)),
        out_shape=jax.ShapeDtypeStruct((n, h), jnp.float32),
        compiler_params=pltpu.CompilerParams(
            dimension_semantics=("parallel", "arbitrary"),
            vmem_limit_bytes=VMEM_LIMIT),
        cost_estimate=pl.CostEstimate(flops=flops, transcendentals=0,
                                      bytes_accessed=bytes_accessed),
    )(adj_norm_bf16, xw_bf16, b, x_res)


def pallas_hash_prop(adj_src_dst, minhash, hll, *, alpha):
    ns, nd = adj_src_dst.shape
    p = minhash.shape[1]
    r = hll.shape[1]
    ts = _tile(ns, 256, min_t=8)      # source chunk (sublane axis of adjacency)
    td = _tile(nd, 256, min_t=128)    # destination tile (lane axis of adjacency)
    kernel = functools.partial(hash_prop_kernel, alpha=alpha)
    return pl.pallas_call(
        kernel,
        grid=(nd // td, ns // ts),
        in_specs=[pl.BlockSpec((ts, td), lambda d, s: (s, d)),
                  pl.BlockSpec((ts, p), lambda d, s: (s, 0)),
                  pl.BlockSpec((ts, r), lambda d, s: (s, 0))],
        out_specs=(pl.BlockSpec((td, p), lambda d, s: (d, 0)),
                   pl.BlockSpec((td, r), lambda d, s: (d, 0)),
                   pl.BlockSpec((td, CARD_LANES), lambda d, s: (d, 0))),
        out_shape=(jax.ShapeDtypeStruct((nd, p), jnp.int32),
                   jax.ShapeDtypeStruct((nd, r), jnp.int32),
                   jax.ShapeDtypeStruct((nd, CARD_LANES), jnp.float32)),
        compiler_params=pltpu.CompilerParams(
            dimension_semantics=("parallel", "arbitrary"),
            vmem_limit_bytes=VMEM_LIMIT),
    )(adj_src_dst, minhash, hll)


# ----------------------------- host-side glue -------------------------------

def dense_adj_src_dst(edge_index, num_nodes, add_self_loops=False):
    """Dense adjacency with a[src, dst] = 1 (hash propagation layout)."""
    src, dst = edge_index[0], edge_index[1]
    a = jnp.zeros((num_nodes, num_nodes), jnp.float32)
    a = a.at[src, dst].set(1.0)
    if add_self_loops:
        idx = jnp.arange(num_nodes)
        a = a.at[idx, idx].set(1.0)
    return a


def gcn_norm_dense(edge_index, num_nodes):
    # \hat{A} = D^{-1/2} (A + I) D^{-1/2}, row = destination
    src, dst = edge_index[0], edge_index[1]
    a = jnp.zeros((num_nodes, num_nodes), jnp.float32)
    a = a.at[dst, src].set(1.0)
    idx = jnp.arange(num_nodes)
    a = a.at[idx, idx].set(1.0)
    deg = jnp.sum(a, axis=1)
    dinv = jnp.where(deg > 0, 1.0 / jnp.sqrt(deg), 0.0)
    return dinv[:, None] * a * dinv[None, :]


class ELPHPallas:
    """JAX/Pallas port of ELPH.forward (eval mode)."""

    def __init__(self, key, num_features, hidden_channels, max_hash_hops=2,
                 minhash_num_perm=128, hll_p=4, feature_prop='residual',
                 use_feature=True):
        self.num_layers = max_hash_hops
        self.num_perm = minhash_num_perm
        # NOTE: the PyTorch code computes `self.hll_size = 2 ^ args.hll_p` (XOR bug),
        # but register-array shapes are determined by ElphHashes outputs of width
        # 2**hll_p, which is what we use.
        self.hll_regs = 2 ** hll_p
        self._alpha = _hll_alpha(self.hll_regs)
        self.feature_prop = feature_prop
        self.use_feature = use_feature
        self.dim = max_hash_hops * (max_hash_hops + 2)

        ks = jax.random.split(key, 2 * (self.num_layers + 1) + 2)
        s = 0.1
        # feature_encoder (used when feature_prop in {'residual', 'cat'});
        # weights stored bf16 for the MXU, biases stay f32.
        self.w_enc = (s * jax.random.normal(
            ks[0], (num_features, hidden_channels), jnp.float32)).astype(jnp.bfloat16)
        self.b_enc = s * jax.random.normal(ks[1], (1, hidden_channels), jnp.float32)
        # GCNConv stack: hidden -> hidden (encoder already mapped F -> hidden)
        self.gcn_w, self.gcn_b = [], []
        for i in range(self.num_layers):
            self.gcn_w.append((s * jax.random.normal(
                ks[2 + 2 * i], (hidden_channels, hidden_channels),
                jnp.float32)).astype(jnp.bfloat16))
            self.gcn_b.append(s * jax.random.normal(
                ks[3 + 2 * i], (1, hidden_channels), jnp.float32))

        # TODO(synk): ElphHashes.initialise_minhash / initialise_hll are not provided;
        #             deterministic synthetic per-node hash states are generated instead
        #             (and minhash is int32, not datasketch's int64 range).
        self.init_hashes = None
        self.init_hll = None
        self._init_key = ks[-1]

    def _initialise_hashes(self, num_nodes):
        k1, k2 = jax.random.split(self._init_key)
        init_minhash = jax.random.randint(
            k1, (num_nodes, self.num_perm), 0, 2 ** 31 - 1, dtype=jnp.int32)
        init_hll = jax.random.randint(
            k2, (num_nodes, self.hll_regs), 0, 8, dtype=jnp.int32)
        return init_minhash, init_hll

    def _encode_features(self, x):
        if self.use_feature:
            x = pallas_linear(x, self.w_enc, self.b_enc)
            # F.dropout(..., training=False) -> identity
        else:
            x = None
        return x

    def feature_conv(self, x, adj_norm_bf16, k):
        if not self.use_feature:
            return None
        xw = pallas_matmul(x, self.gcn_w[k - 1])                 # bf16 [N, H]
        out = pallas_gcn_spmm(adj_norm_bf16, xw, self.gcn_b[k - 1], x,
                              residual=(self.feature_prop == 'residual'))
        # dropout -> identity (eval)
        return out

    def forward(self, x, edge_index):
        num_nodes = x.shape[0]

        # hash_edge_index, _ = add_self_loops(edge_index)  -> dense [N_src, N_dst] mask
        adj_hash = dense_adj_src_dst(edge_index, num_nodes, add_self_loops=True)
        # GCNConv normalization, cast once to bf16 for the MXU.
        adj_norm_bf16 = gcn_norm_dense(edge_index, num_nodes).astype(jnp.bfloat16)

        if self.init_hashes is None or self.init_hll is None:
            self.init_hashes, self.init_hll = self._initialise_hashes(num_nodes)

        cards = jnp.zeros((num_nodes, self.num_layers), jnp.float32)
        node_hashings_table = {}

        minhash = None
        hll = None
        for k in range(self.num_layers + 1):
            if k == 0:
                minhash = self.init_hashes
                hll = self.init_hll
                if self.feature_prop in {'residual', 'cat'}:
                    x = self._encode_features(x)
            else:
                minhash, hll, card_full = pallas_hash_prop(
                    adj_hash, minhash, hll, alpha=self._alpha)
                cards = cards.at[:, k - 1].set(card_full[:, 0])
                x = self.feature_conv(x, adj_norm_bf16, k)
            node_hashings_table[k] = {'hll': hll, 'minhash': minhash}

        return x, node_hashings_table, cards


# --------------------------------- main -------------------------------------

if __name__ == "__main__":
    key = jax.random.PRNGKey(0)
    k_x, k_model = jax.random.split(key)

    N, F, H = 16, 8, 32           # nodes, raw features, hidden channels
    HOPS, NUM_PERM, HLL_P = 2, 128, 4

    x = jax.random.normal(k_x, (N, F), jnp.float32)

    # simple undirected ring graph (both edge directions present, like PyG edge_index)
    src = jnp.arange(N, dtype=jnp.int32)
    dst = (src + 1) % N
    edge_index = jnp.stack([jnp.concatenate([src, dst]),
                            jnp.concatenate([dst, src])])   # [2, 32]

    model = ELPHPallas(k_model, num_features=F, hidden_channels=H,
                       max_hash_hops=HOPS, minhash_num_perm=NUM_PERM,
                       hll_p=HLL_P, feature_prop='residual', use_feature=True)

    x_out, table, cards = model.forward(x, edge_index)
    jax.block_until_ready((x_out, cards,
                           table[HOPS]['minhash'], table[HOPS]['hll']))

    assert x_out.shape == (N, H)
    assert cards.shape == (N, HOPS)
    assert table[HOPS]['minhash'].shape == (N, NUM_PERM)
    assert table[HOPS]['hll'].shape == (N, 2 ** HLL_P)

    print("KERNEL_OK")
</pallas_src>

<mosaic_0001>
module attributes {stable_mosaic.version = 11 : i64} {
  func.func @linear_kernel(%arg0: i32, %arg1: memref<16x8xf32, #tpu.memory_space<vmem>>, %arg2: memref<8x32xbf16, #tpu.memory_space<vmem>>, %arg3: memref<1x32xf32, #tpu.memory_space<vmem>>, %arg4: memref<16x32xf32, #tpu.memory_space<vmem>>) attributes {dimension_semantics = [#tpu.dimension_semantics<parallel>], iteration_bounds = array<i64: 1>, scalar_prefetch = 0 : i64, scratch_operands = 0 : i64, tpu.core_type = #tpu.core_type<tc>, window_params = [{transform_indices = @transform_0, window_bounds = array<i64: 16, 8>}, {pipeline_mode = #tpu.pipeline_mode<synchronous>, transform_indices = @transform_1, window_bounds = array<i64: 8, 32>}, {pipeline_mode = #tpu.pipeline_mode<synchronous>, transform_indices = @transform_2, window_bounds = array<i64: 1, 32>}, {transform_indices = @transform_3, window_bounds = array<i64: 16, 32>}]} {
    %c0 = arith.constant 0 : index
    %c0_0 = arith.constant 0 : index
    %0 = vector.load %arg1[%c0, %c0_0] : memref<16x8xf32, #tpu.memory_space<vmem>>, vector<16x8xf32>
    %1 = arith.truncf %0 : vector<16x8xf32> to vector<16x8xbf16>
    %c0_1 = arith.constant 0 : index
    %c0_2 = arith.constant 0 : index
    %2 = vector.load %arg2[%c0_1, %c0_2] : memref<8x32xbf16, #tpu.memory_space<vmem>>, vector<8x32xbf16>
    %cst = arith.constant dense<0.000000e+00> : vector<16x32xf32>
    %3 = tpu.matmul %1, %2, %cst {dimension_numbers = #tpu.dot_dimension_numbers<[1], [0], [0], [1], [0, 0, 1, 1], [], []>} : vector<16x8xbf16>, vector<8x32xbf16>, vector<16x32xf32> -> vector<16x32xf32>
    %c0_3 = arith.constant 0 : index
    %c0_4 = arith.constant 0 : index
    %4 = vector.load %arg3[%c0_3, %c0_4] : memref<1x32xf32, #tpu.memory_space<vmem>>, vector<1x32xf32>
    %5 = vector.broadcast %4 : vector<1x32xf32> to vector<16x32xf32>
    %6 = arith.addf %3, %5 : vector<16x32xf32>
    %c0_5 = arith.constant 0 : index
    %c0_6 = arith.constant 0 : index
    %7 = vector.load %arg4[%c0_5, %c0_6] : memref<16x32xf32, #tpu.memory_space<vmem>>, vector<16x32xf32>
    tpu.vector_store %arg4[%c0_5, %c0_6], %6 {strides = array<i32>} : memref<16x32xf32, #tpu.memory_space<vmem>>, vector<16x32xf32>,
    return
  }
  func.func @transform_0(%arg0: i32) -> (i32, i32) {
    %c0_i32 = arith.constant 0 : i32
    %c0_i32_0 = arith.constant 0 : i32
    return %arg0, %c0_i32 : i32, i32
  }
  func.func @transform_1(%arg0: i32) -> (i32, i32) {
    %c0_i32 = arith.constant 0 : i32
    %c0_i32_0 = arith.constant 0 : i32
    %c0_i32_1 = arith.constant 0 : i32
    return %c0_i32, %c0_i32_0 : i32, i32
  }
  func.func @transform_2(%arg0: i32) -> (i32, i32) {
    %c0_i32 = arith.constant 0 : i32
    %c0_i32_0 = arith.constant 0 : i32
    %c0_i32_1 = arith.constant 0 : i32
    return %c0_i32, %c0_i32_0 : i32, i32
  }
  func.func @transform_3(%arg0: i32) -> (i32, i32) {
    %c0_i32 = arith.constant 0 : i32
    %c0_i32_0 = arith.constant 0 : i32
    return %arg0, %c0_i32 : i32, i32
  }
}

</mosaic_0001>

<llo_original>
// kernel: tpu_custom_call.1
$region0: #{tpu_custom_call.1}
  #allocation0 [shape = 'u32[]', space=smem, size = 0x4, offset = 0x4, fixed_abs, tag = 'smem constant byte address 0x4 - core index']
  #allocation1 [shape = 'u32[72,128]{1,0:T(1,128)}', space=vmem, size = 0x9000, scoped, tag = 'internal scratch']
  %s0 = inlined_call_operand.vmem [shape: f32[16,8], index: 0, kind: input, shape index: {}]
  %s1 = inlined_call_operand.vmem [shape: bf16[8,32], index: 1, kind: input, shape index: {}]
  %s2 = inlined_call_operand.vmem [shape: f32[1,32], index: 2, kind: input, shape index: {}]
  %s3 = inlined_call_operand.hbm [shape: f32[16,32], index: 3, kind: output, shape index: {}]
  %s4 = sld [smem:[#allocation0]]
  $region22: #{tpu_custom_call.1} parent=0
    _
  %s6 = ssub.s32 1, %s4
  %s7 = scalar_select 0, %s6, %s4
  $region1: #{tpu_custom_call.1} parent=0
    #allocation2 [shape = 'u8[8192]{0}', space=vmem, size = 0x2000, scoped, tag = 'output window, operand 0, single buffered']
    #allocation3 [shape = 's32[1]{0}', space=sflag, size = 0x4, scoped, tag = 'scoped memory for tpu_custom_call.1']
    %8 = vsyncpa [#allocation3], 0
    // Predicated region
    $region2: #{tpu_custom_call.1} parent=1 // pred_check
      _
    $region3: #{tpu_custom_call.1} parent=1 // pred_check_branch
      %10 = sbr.rel (0) target = $region5
    $region4: #{tpu_custom_call.1} parent=1 // pred_region
      _
    $region5: #{tpu_custom_call.1} parent=1 // pred_fallthru
      _
    // Predicated region
    $region6: #{tpu_custom_call.1} parent=1 // pred_check
      _
    $region7: #{tpu_custom_call.1} parent=1 // pred_check_branch
      %12 = sbr.rel (0) target = $region9
    $region8: #{tpu_custom_call.1} parent=1 // pred_region
      _
    $region9: #{tpu_custom_call.1} parent=1 // pred_fallthru
      _
    // Predicated region
    $region10: #{tpu_custom_call.1} parent=1 // pred_check
      _
    $region11: #{tpu_custom_call.1} parent=1 // pred_check_branch
      %14 = sbr.rel (0) target = $region13
    $region12: #{tpu_custom_call.1} parent=1 // pred_region
      _
    $region13: #{tpu_custom_call.1} parent=1 // pred_fallthru
      _
    %v16 = vld [vmem:[%s0] sm:$0xff]
    %v17 = vld [vmem:[%s0 + $0x8] sm:$0xff]
    %v18 = vpack.c.bf16 %v17, %v16
    %v19 = vld [vmem:[%s1] sm:$0xf]
    %v20 = vld [vmem:[%s2] sm:$0x1]
    %v22 = vperm.slane %v20, 0
    %vm24 = vcmask 64512
    %v26 = vsel %vm24, %v18, 0
    %vm28 = vcmask 1043456
    %v30 = vsel %vm28, %v19, 0
    %32 = vmatpush.bf16.msra.mxu0 0
    %33 = vmatpush.bf16.msra.mxu0 0
    %34 = vmatpush.bf16.msra.mxu0 0
    %35 = vmatpush.bf16.msra.mxu0 0
    %36 = vmatpush.bf16.msra.mxu0 0
    %37 = vmatpush.bf16.msra.mxu0 0
    %38 = vmatpush.bf16.msra.mxu0 0
    %39 = vmatpush.bf16.msra.mxu0 %v30
    %40 = vmatmul.bf16.gmra.mxu0 %v26
    %v41 = vpop.f32.mrf.mxu0
    %v42 = vadd.f32 %v22, %v41
    %v43 = vpop.f32.mrf.mxu0
    %v44 = vadd.f32 %v22, %v43
    %45 = vdwg.mxu0
    %vm46 = vcmask 261120
    %47 = vst.msk [vmem:[#allocation2] sm:$0xff] %vm46, %v42
    %48 = vst.msk [vmem:[#allocation2 + $0x8] sm:$0xff] %vm46, %v44
    // Predicated region
    $region14: #{tpu_custom_call.1} parent=1 // pred_check
      _
    $region15: #{tpu_custom_call.1} parent=1 // pred_check_branch
      %50 = sbr.rel (0) target = $region17
    $region16: #{tpu_custom_call.1} parent=1 // pred_region
      %52 = vsyncadd [#allocation3], 0
      %s53 = sshll.u32 [#allocation2], 4
      %s54 = int_to_ptr.vmem [resolvable:$true] %s53
      %s55 = sshll.u32 %s3, 4
      %s56 = int_to_ptr.hbm [resolvable:$true] %s55
      %61 = dma.vmem_to_hbm [thread:$0]  %s54, 256, %s56, [#allocation3], 128, 128, 8
    $region17: #{tpu_custom_call.1} parent=1 // pred_fallthru
      _
    // Predicated region
    $region18: #{tpu_custom_call.1} parent=1 // pred_check
      _
    $region19: #{tpu_custom_call.1} parent=1 // pred_check_branch
      %63 = sbr.rel (0) target = $region21
    $region20: #{tpu_custom_call.1} parent=1 // pred_region
      %65 = dma.done [#allocation3], 256
    $region21: #{tpu_custom_call.1} parent=1 // pred_fallthru
      _
    %66 = vsyncpa [#allocation3], 1

</llo_original>
